<compile_context>
chip_gen: v7x
topology: tpu7x:2x2x1
jax: 0.10.0
libtpu: 0.0.40
codegen_flags: <defaults>
</compile_context>

<pallas_src>
import functools

import jax
import jax.numpy as jnp
from jax.experimental import pallas as pl
from jax.experimental.pallas import tpu as pltpu


def _attention_kernel(x_ref, w1t_ref, w2t_ref, o_ref, sum_acc, max_acc,
                      *, hw_total, bt, t_hw, needs_mask):
    # x_ref:   (Bt, C, T_hw)  current spatial tile of a batch group (native dtype)
    # w1t_ref: (C, Ch)        fc1 weight transposed
    # w2t_ref: (Ch, C)        fc2 weight transposed
    # o_ref:   (Bt, 1, C)     sigmoid(channel attention), resident across hw axis
    # sum_acc / max_acc: (Bt, C, 1) f32 running accumulators (C stays on sublanes)
    h = pl.program_id(1)

    @pl.when(h == 0)
    def _init():
        sum_acc[...] = jnp.zeros_like(sum_acc)
        max_acc[...] = jnp.full_like(max_acc, -jnp.inf)

    x = x_ref[...].astype(jnp.float32)                       # accumulate in f32

    if needs_mask:
        lane = jax.lax.broadcasted_iota(jnp.int32, x.shape, 2)
        valid = (h * t_hw + lane) < hw_total
        x_sum = jnp.where(valid, x, 0.0)
        x_max = jnp.where(valid, x, -jnp.inf)
    else:
        x_sum = x
        x_max = x

    sum_acc[...] += jnp.sum(x_sum, axis=-1, keepdims=True)
    max_acc[...] = jnp.maximum(max_acc[...], jnp.max(x_max, axis=-1, keepdims=True))

    @pl.when(h == pl.num_programs(1) - 1)
    def _finalize():
        C = o_ref.shape[-1]
        avg = sum_acc[...].reshape(bt, C) * (1.0 / hw_total)  # (Bt, C)
        mx = max_acc[...].reshape(bt, C)                      # (Bt, C)
        pooled = jnp.concatenate([avg, mx], axis=0)           # (2*Bt, C) single LHS
        h1 = jnp.dot(pooled, w1t_ref[...], preferred_element_type=jnp.float32)
        h1 = jnp.maximum(h1, 0.0)                             # ReLU
        h2 = jnp.dot(h1, w2t_ref[...], preferred_element_type=jnp.float32)
        out = jax.nn.sigmoid(h2[:bt] + h2[bt:])               # (Bt, C)
        o_ref[...] = out.reshape(bt, 1, C).astype(o_ref.dtype)


def _choose_tiles(N, C, HW, itemsize, block_budget):
    """Pick (Bt, T_hw): T_hw a multiple of 128 (or full HW), block <= budget."""
    row_bytes = C * itemsize
    if HW * row_bytes <= block_budget:
        t_hw = HW                                   # whole spatial extent fits
    else:
        t_hw = (block_budget // row_bytes) // 128 * 128
        t_hw = max(128, min(t_hw, (HW // 128) * 128))
    per_batch = max(1, t_hw * row_bytes)
    bt = max(1, min(N, block_budget // per_batch))
    while N % bt != 0:                              # keep the batch grid exact
        bt -= 1
    return bt, t_hw


def attention_forward(x_nchw, w1, w2, *, block_budget_bytes=4 << 20):
    """x_nchw: (N, C, H, W); w1: (Ch, C) fc1 weight; w2: (C, Ch) fc2 weight.
    Returns (N, C, 1, 1), matching the PyTorch module output."""
    N, C, H, W = x_nchw.shape
    Ch = w1.shape[0]
    HW = H * W

    x = x_nchw.reshape(N, C, HW)                    # native dtype, no extra pass
    itemsize = jnp.dtype(x.dtype).itemsize

    bt, t_hw = _choose_tiles(N, C, HW, itemsize, block_budget_bytes)
    n_hw = pl.cdiv(HW, t_hw)
    needs_mask = (HW % t_hw) != 0

    w1t = jnp.asarray(w1, jnp.float32).T            # (C, Ch)
    w2t = jnp.asarray(w2, jnp.float32).T            # (Ch, C)

    kernel = functools.partial(
        _attention_kernel, hw_total=HW, bt=bt, t_hw=t_hw, needs_mask=needs_mask)

    cost = pl.CostEstimate(
        flops=2 * N * C * HW + 4 * N * (C * Ch + Ch * C),
        transcendentals=N * C,
        bytes_accessed=x.size * itemsize + (w1t.size + w2t.size) * 4
                       + N * C * itemsize,
    )

    out = pl.pallas_call(
        kernel,
        out_shape=jax.ShapeDtypeStruct((N, 1, C), x.dtype),
        grid=(N // bt, n_hw),
        in_specs=[
            pl.BlockSpec((bt, C, t_hw), lambda b, h: (b, 0, h)),
            pl.BlockSpec((C, Ch), lambda b, h: (0, 0)),
            pl.BlockSpec((Ch, C), lambda b, h: (0, 0)),
        ],
        out_specs=pl.BlockSpec((bt, 1, C), lambda b, h: (b, 0, 0)),
        scratch_shapes=[
            pltpu.VMEM((bt, C, 1), jnp.float32),    # running sum
            pltpu.VMEM((bt, C, 1), jnp.float32),    # running max
        ],
        compiler_params=pltpu.CompilerParams(
            dimension_semantics=("parallel", "arbitrary"),
            vmem_limit_bytes=32 * 1024 * 1024,
        ),
        cost_estimate=cost,
    )(x, w1t, w2t)

    return out.reshape(N, C, 1, 1).astype(x_nchw.dtype)


def _reference(x_nchw, w1, w2):
    # Plain-JAX reference mirroring the PyTorch forward.
    avg = jnp.mean(x_nchw.astype(jnp.float32), axis=(2, 3))   # (N, C)
    mx = jnp.max(x_nchw.astype(jnp.float32), axis=(2, 3))     # (N, C)

    def mlp(v):
        h = jnp.maximum(v @ w1.T, 0.0)
        return h @ w2.T

    out = jax.nn.sigmoid(mlp(avg) + mlp(mx))
    return out[:, :, None, None].astype(x_nchw.dtype)


if __name__ == "__main__":
    key = jax.random.PRNGKey(0)
    N, C, H, W = 2, 4, 16, 16
    ratio = 2
    Ch = C // ratio

    k_x, k_w1, k_w2 = jax.random.split(key, 3)
    x = jax.random.normal(k_x, (N, C, H, W), dtype=jnp.float32)
    # PyTorch Conv2d weight shapes squeezed: fc1 -> (Ch, C); fc2 -> (C, Ch).
    w1 = jax.random.normal(k_w1, (Ch, C), dtype=jnp.float32) * 0.5
    w2 = jax.random.normal(k_w2, (C, Ch), dtype=jnp.float32) * 0.5

    out = attention_forward(x, w1, w2)
    out = jax.block_until_ready(out)

    ref = _reference(x, w1, w2)
    assert out.shape == (N, C, 1, 1)
    assert jnp.allclose(out, ref, atol=1e-5, rtol=1e-5), "mismatch vs reference"

    print("KERNEL_OK")
</pallas_src>

<mosaic_0001>
module attributes {stable_mosaic.version = 11 : i64} {
  func.func @_attention_kernel(%arg0: i32, %arg1: i32, %arg2: memref<2x4x256xf32, #tpu.memory_space<vmem>>, %arg3: memref<4x2xf32, #tpu.memory_space<vmem>>, %arg4: memref<2x4xf32, #tpu.memory_space<vmem>>, %arg5: memref<2x1x4xf32, #tpu.memory_space<vmem>>, %arg6: memref<2x4x1xf32, #tpu.memory_space<vmem>>, %arg7: memref<2x4x1xf32, #tpu.memory_space<vmem>>) attributes {dimension_semantics = [#tpu.dimension_semantics<parallel>, #tpu.dimension_semantics<arbitrary>], iteration_bounds = array<i64: 1, 1>, scalar_prefetch = 0 : i64, scratch_operands = 2 : i64, tpu.core_type = #tpu.core_type<tc>, window_params = [{transform_indices = @transform_0, window_bounds = array<i64: 2, 4, 256>}, {pipeline_mode = #tpu.pipeline_mode<synchronous>, transform_indices = @transform_1, window_bounds = array<i64: 4, 2>}, {pipeline_mode = #tpu.pipeline_mode<synchronous>, transform_indices = @transform_2, window_bounds = array<i64: 2, 4>}, {transform_indices = @transform_3, window_bounds = array<i64: 2, 1, 4>}]} {
    %c0_i32 = arith.constant 0 : i32
    %0 = arith.cmpi eq, %arg1, %c0_i32 : i32
    %1 = arith.extui %0 : i1 to i32
    %c0_i32_0 = arith.constant 0 : i32
    %2 = arith.cmpi ne, %1, %c0_i32_0 : i32
    scf.if %2 {
      %cst_18 = arith.constant 0.000000e+00 : f32
      %17 = vector.broadcast %cst_18 : f32 to vector<2x4x1xf32>
      %c0_19 = arith.constant 0 : index
      %c0_20 = arith.constant 0 : index
      %c0_21 = arith.constant 0 : index
      %18 = vector.load %arg6[%c0_19, %c0_20, %c0_21] : memref<2x4x1xf32, #tpu.memory_space<vmem>>, vector<2x4x1xf32>
      tpu.vector_store %arg6[%c0_19, %c0_20, %c0_21], %17 {strides = array<i32>} : memref<2x4x1xf32, #tpu.memory_space<vmem>>, vector<2x4x1xf32>,
      %cst_22 = arith.constant 0xFF800000 : f32
      %19 = vector.broadcast %cst_22 : f32 to vector<2x4x1xf32>
      %c0_23 = arith.constant 0 : index
      %c0_24 = arith.constant 0 : index
      %c0_25 = arith.constant 0 : index
      %20 = vector.load %arg7[%c0_23, %c0_24, %c0_25] : memref<2x4x1xf32, #tpu.memory_space<vmem>>, vector<2x4x1xf32>
      tpu.vector_store %arg7[%c0_23, %c0_24, %c0_25], %19 {strides = array<i32>} : memref<2x4x1xf32, #tpu.memory_space<vmem>>, vector<2x4x1xf32>,
    } else {
    }
    %c0 = arith.constant 0 : index
    %c0_1 = arith.constant 0 : index
    %c0_2 = arith.constant 0 : index
    %3 = vector.load %arg2[%c0, %c0_1, %c0_2] : memref<2x4x256xf32, #tpu.memory_space<vmem>>, vector<2x4x256xf32>
    %c0_3 = arith.constant 0 : index
    %c0_4 = arith.constant 0 : index
    %c0_5 = arith.constant 0 : index
    %4 = vector.load %arg6[%c0_3, %c0_4, %c0_5] : memref<2x4x1xf32, #tpu.memory_space<vmem>>, vector<2x4x1xf32>
    %cst = arith.constant dense<0.000000e+00> : vector<2x4xf32>
    %5 = vector.multi_reduction <add>, %3, %cst [2] : vector<2x4x256xf32> to vector<2x4xf32>
    %6 = vector.shape_cast %5 : vector<2x4xf32> to vector<2x4x1xf32>
    %7 = arith.addf %4, %6 : vector<2x4x1xf32>
    %c0_6 = arith.constant 0 : index
    %c0_7 = arith.constant 0 : index
    %c0_8 = arith.constant 0 : index
    %8 = vector.load %arg6[%c0_6, %c0_7, %c0_8] : memref<2x4x1xf32, #tpu.memory_space<vmem>>, vector<2x4x1xf32>
    tpu.vector_store %arg6[%c0_6, %c0_7, %c0_8], %7 {strides = array<i32>} : memref<2x4x1xf32, #tpu.memory_space<vmem>>, vector<2x4x1xf32>,
    %c0_9 = arith.constant 0 : index
    %c0_10 = arith.constant 0 : index
    %c0_11 = arith.constant 0 : index
    %9 = vector.load %arg7[%c0_9, %c0_10, %c0_11] : memref<2x4x1xf32, #tpu.memory_space<vmem>>, vector<2x4x1xf32>
    %cst_12 = arith.constant dense<0xFF800000> : vector<2x4xf32>
    %10 = vector.multi_reduction <maximumf>, %3, %cst_12 [2] : vector<2x4x256xf32> to vector<2x4xf32>
    %11 = vector.shape_cast %10 : vector<2x4xf32> to vector<2x4x1xf32>
    %12 = arith.maximumf %9, %11 : vector<2x4x1xf32>
    %c0_13 = arith.constant 0 : index
    %c0_14 = arith.constant 0 : index
    %c0_15 = arith.constant 0 : index
    %13 = vector.load %arg7[%c0_13, %c0_14, %c0_15] : memref<2x4x1xf32, #tpu.memory_space<vmem>>, vector<2x4x1xf32>
    tpu.vector_store %arg7[%c0_13, %c0_14, %c0_15], %12 {strides = array<i32>} : memref<2x4x1xf32, #tpu.memory_space<vmem>>, vector<2x4x1xf32>,
    %c0_i32_16 = arith.constant 0 : i32
    %14 = arith.cmpi eq, %arg1, %c0_i32_16 : i32
    %15 = arith.extui %14 : i1 to i32
    %c0_i32_17 = arith.constant 0 : i32
    %16 = arith.cmpi ne, %15, %c0_i32_17 : i32
    scf.if %16 {
      %c0_18 = arith.constant 0 : index
      %c0_19 = arith.constant 0 : index
      %c0_20 = arith.constant 0 : index
      %17 = vector.load %arg6[%c0_18, %c0_19, %c0_20] : memref<2x4x1xf32, #tpu.memory_space<vmem>>, vector<2x4x1xf32>
      %18 = vector.shape_cast %17 : vector<2x4x1xf32> to vector<2x4xf32>
      %cst_21 = arith.constant 3.906250e-03 : f32
      %19 = vector.broadcast %cst_21 : f32 to vector<2x4xf32>
      %20 = arith.mulf %18, %19 : vector<2x4xf32>
      %c0_22 = arith.constant 0 : index
      %c0_23 = arith.constant 0 : index
      %c0_24 = arith.constant 0 : index
      %21 = vector.load %arg7[%c0_22, %c0_23, %c0_24] : memref<2x4x1xf32, #tpu.memory_space<vmem>>, vector<2x4x1xf32>
      %22 = vector.shape_cast %21 : vector<2x4x1xf32> to vector<2x4xf32>
      %23 = tpu.concatenate %20, %22 in 0 : vector<2x4xf32>, vector<2x4xf32> -> vector<4x4xf32>
      %c0_25 = arith.constant 0 : index
      %c0_26 = arith.constant 0 : index
      %24 = vector.load %arg3[%c0_25, %c0_26] : memref<4x2xf32, #tpu.memory_space<vmem>>, vector<4x2xf32>
      %cst_27 = arith.constant dense<0.000000e+00> : vector<4x2xf32>
      %25 = tpu.matmul %23, %24, %cst_27 {dimension_numbers = #tpu.dot_dimension_numbers<[1], [0], [0], [1], [0, 0, 1, 1], [], []>} : vector<4x4xf32>, vector<4x2xf32>, vector<4x2xf32> -> vector<4x2xf32>
      %cst_28 = arith.constant 0.000000e+00 : f32
      %26 = vector.broadcast %cst_28 : f32 to vector<4x2xf32>
      %27 = arith.maximumf %25, %26 : vector<4x2xf32>
      %c0_29 = arith.constant 0 : index
      %c0_30 = arith.constant 0 : index
      %28 = vector.load %arg4[%c0_29, %c0_30] : memref<2x4xf32, #tpu.memory_space<vmem>>, vector<2x4xf32>
      %cst_31 = arith.constant dense<0.000000e+00> : vector<4x4xf32>
      %29 = tpu.matmul %27, %28, %cst_31 {dimension_numbers = #tpu.dot_dimension_numbers<[1], [0], [0], [1], [0, 0, 1, 1], [], []>} : vector<4x2xf32>, vector<2x4xf32>, vector<4x4xf32> -> vector<4x4xf32>
      %30 = vector.extract_strided_slice %29 {offsets = [0, 0], sizes = [2, 4], strides = [1, 1]} : vector<4x4xf32> to vector<2x4xf32>
      %31 = vector.extract_strided_slice %29 {offsets = [2, 0], sizes = [2, 4], strides = [1, 1]} : vector<4x4xf32> to vector<2x4xf32>
      %32 = arith.addf %30, %31 : vector<2x4xf32>
      %33 = arith.negf %32 : vector<2x4xf32>
      %34 = math.exp %33 : vector<2x4xf32>
      %cst_32 = arith.constant 1.000000e+00 : f32
      %35 = vector.broadcast %cst_32 : f32 to vector<2x4xf32>
      %36 = arith.addf %35, %34 : vector<2x4xf32>
      %37 = arith.divf %35, %36 : vector<2x4xf32>
      %38 = vector.shape_cast %37 : vector<2x4xf32> to vector<2x1x4xf32>
      %c0_33 = arith.constant 0 : index
      %c0_34 = arith.constant 0 : index
      %c0_35 = arith.constant 0 : index
      %39 = vector.load %arg5[%c0_33, %c0_34, %c0_35] : memref<2x1x4xf32, #tpu.memory_space<vmem>>, vector<2x1x4xf32>
      tpu.vector_store %arg5[%c0_33, %c0_34, %c0_35], %38 {strides = array<i32>} : memref<2x1x4xf32, #tpu.memory_space<vmem>>, vector<2x1x4xf32>,
    } else {
    }
    return
  }
  func.func @transform_0(%arg0: i32, %arg1: i32) -> (i32, i32, i32) {
    %c0_i32 = arith.constant 0 : i32
    %c0_i32_0 = arith.constant 0 : i32
    return %arg0, %c0_i32, %arg1 : i32, i32, i32
  }
  func.func @transform_1(%arg0: i32, %arg1: i32) -> (i32, i32) {
    %c0_i32 = arith.constant 0 : i32
    %c0_i32_0 = arith.constant 0 : i32
    %c0_i32_1 = arith.constant 0 : i32
    return %c0_i32, %c0_i32_0 : i32, i32
  }
  func.func @transform_2(%arg0: i32, %arg1: i32) -> (i32, i32) {
    %c0_i32 = arith.constant 0 : i32
    %c0_i32_0 = arith.constant 0 : i32
    %c0_i32_1 = arith.constant 0 : i32
    return %c0_i32, %c0_i32_0 : i32, i32
  }
  func.func @transform_3(%arg0: i32, %arg1: i32) -> (i32, i32, i32) {
    %c0_i32 = arith.constant 0 : i32
    %c0_i32_0 = arith.constant 0 : i32
    %c0_i32_1 = arith.constant 0 : i32
    return %arg0, %c0_i32, %c0_i32_0 : i32, i32, i32
  }
}

</mosaic_0001>

<llo_original>
// kernel: tpu_custom_call.1
$region0: #{tpu_custom_call.1}
  #allocation0 [shape = 'u32[]', space=smem, size = 0x4, offset = 0x4, fixed_abs, tag = 'smem constant byte address 0x4 - core index']
  #allocation1 [shape = 'u32[144,128]{1,0:T(1,128)}', space=vmem, size = 0x12000, scoped, tag = 'internal scratch']
  #allocation2 [shape = 'f32[2,4,1]{2,1,0:T(4,128)}', space=vmem, size = 0x1000, scoped, tag = 'scratch operand']
  #allocation3 [shape = 'f32[2,4,1]{2,1,0:T(4,128)}', space=vmem, size = 0x1000, scoped, tag = 'scratch operand']
  %s0 = inlined_call_operand.hbm [shape: f32[2,4,256], index: 0, kind: input, shape index: {}]
  %s1 = inlined_call_operand.vmem [shape: f32[4,2], index: 1, kind: input, shape index: {}]
  %s2 = inlined_call_operand.vmem [shape: f32[2,4], index: 2, kind: input, shape index: {}]
  %s3 = inlined_call_operand.hbm [shape: f32[2,1,4], index: 3, kind: output, shape index: {}]
  %s4 = sld [smem:[#allocation0]]
  $region34: #{tpu_custom_call.1} parent=0
    _
  %s6 = ssub.s32 1, %s4
  %s7 = scalar_select 0, %s6, %s4
  $region1: #{tpu_custom_call.1} parent=0
    #allocation4 [shape = 'u8[8192]{0}', space=vmem, size = 0x2000, scoped, tag = 'input window, operand 0, single buffered']
    #allocation5 [shape = 's32[1]{0}', space=sflag, size = 0x4, scoped, tag = 'scoped memory for tpu_custom_call.1']
    #allocation6 [shape = 's32[1]{0}', space=sflag, size = 0x4, scoped, tag = 'scoped memory for tpu_custom_call.1']
    #allocation7 [shape = 'u8[1024]{0}', space=vmem, size = 0x400, scoped, tag = 'output window, operand 0, single buffered']
    %8 = vsyncpa [#allocation5], 0
    %9 = vsyncpa [#allocation6], 0
    // Predicated region
    $region2: #{tpu_custom_call.1} parent=1 // pred_check
      _
    $region3: #{tpu_custom_call.1} parent=1 // pred_check_branch
      %11 = sbr.rel (0) target = $region5
    $region4: #{tpu_custom_call.1} parent=1 // pred_region
      %s13 = ssub.s32 256, 256
      %14 = vsyncadd [#allocation5], %s13
      %s15 = sshll.u32 [#allocation4], 4
      %s16 = int_to_ptr.vmem [resolvable:$true] %s15
      %21 = dma.hbm_to_vmem [thread:$0]  %s0, 256, %s16, [#allocation5], 128, 128, 8
    $region5: #{tpu_custom_call.1} parent=1 // pred_fallthru
      _
    // Predicated region
    $region6: #{tpu_custom_call.1} parent=1 // pred_check
      _
    $region7: #{tpu_custom_call.1} parent=1 // pred_check_branch
      %23 = sbr.rel (0) target = $region9
    $region8: #{tpu_custom_call.1} parent=1 // pred_region
      _
    $region9: #{tpu_custom_call.1} parent=1 // pred_fallthru
      _
    // Predicated region
    $region10: #{tpu_custom_call.1} parent=1 // pred_check
      _
    $region11: #{tpu_custom_call.1} parent=1 // pred_check_branch
      %25 = sbr.rel (0) target = $region13
    $region12: #{tpu_custom_call.1} parent=1 // pred_region
      _
    $region13: #{tpu_custom_call.1} parent=1 // pred_fallthru
      _
    // Predicated region
    $region14: #{tpu_custom_call.1} parent=1 // pred_check
      _
    $region15: #{tpu_custom_call.1} parent=1 // pred_check_branch
      %27 = sbr.rel (0) target = $region17
    $region16: #{tpu_custom_call.1} parent=1 // pred_region
      %28 = dma.done [#allocation5], 256
    $region17: #{tpu_custom_call.1} parent=1 // pred_fallthru
      _
    %p29 = scmp.eq.s32.totalorder 0, 0
    // Predicated region
    $region18: #{tpu_custom_call.1} parent=1 // pred_check
      %p30 = pneg %p29
    $region19: #{tpu_custom_call.1} parent=1 // pred_check_branch
      %32 = sbr.rel (%p30) target = $region21
    $region20: #{tpu_custom_call.1} parent=1 // pred_region
      %vm33 = vcmask 3072
      %34 = vst.msk [vmem:[#allocation2] sm:$0xf] %vm33, 0.0
      %35 = vst.msk [vmem:[#allocation2 + $0x4] sm:$0xf] %vm33, 0.0
      %36 = vst.msk [vmem:[#allocation3] sm:$0xf] %vm33, -inf
      %37 = vst.msk [vmem:[#allocation3 + $0x4] sm:$0xf] %vm33, -inf
    $region21: #{tpu_custom_call.1} parent=1 // pred_fallthru
      _
    %v38 = vld [vmem:[#allocation4] sm:$0xff]
    %v39 = vld [vmem:[#allocation4 + $0x8] sm:$0xff]
    %v40 = vld [vmem:[#allocation2] sm:$0xf]
    %v41 = vld [vmem:[#allocation2 + $0x4] sm:$0xf]
    %v44 = vcombine.high %v38, %v38
    %v45 = vcombine.high %v39, %v39
    %vm48 = vcmask 1043456
    %v49 = vsel %vm48, %v38, 0.0
    %v50 = vsel %vm48, %v44, 0.0
    %v51 = vadd.f32 %v49, %v50
    %52 = vadd.xlane.f32.xlu0 %v51
    %v53 = vpop.xlane.xlu0 %52
    %v54 = vsel %vm48, %v39, 0.0
    %v55 = vsel %vm48, %v45, 0.0
    %v56 = vadd.f32 %v54, %v55
    %57 = vadd.xlane.f32.xlu0 %v56
    %v58 = vpop.xlane.xlu0 %57
    %v59 = vadd.f32 %v40, %v53
    %v60 = vadd.f32 %v41, %v58
    %vm61 = vcmask 3072
    %62 = vst.msk [vmem:[#allocation2] sm:$0xf] %vm61, %v59
    %63 = vst.msk [vmem:[#allocation2 + $0x4] sm:$0xf] %vm61, %v60
    %v64 = vld [vmem:[#allocation3] sm:$0xf]
    %v65 = vld [vmem:[#allocation3 + $0x4] sm:$0xf]
    %v66 = vsel %vm48, %v38, -inf
    %v67 = vsel %vm48, %v44, -inf
    %v68 = vmax.f32 %v66, %v67
    %69 = vmax.xlane.f32.xlu0 %v68
    %v70 = vpop.xlane.xlu0 %69
    %v71 = vsel %vm48, %v39, -inf
    %v72 = vsel %vm48, %v45, -inf
    %v73 = vmax.f32 %v71, %v72
    %74 = vmax.xlane.f32.xlu0 %v73
    %v75 = vpop.xlane.xlu0 %74
    %v76 = vmax.f32 %v64, %v70
    %v77 = vmax.f32 %v65, %v75
    %78 = vst.msk [vmem:[#allocation3] sm:$0xf] %vm61, %v76
    %79 = vst.msk [vmem:[#allocation3 + $0x4] sm:$0xf] %vm61, %v77
    // Predicated region
    $region22: #{tpu_custom_call.1} parent=1 // pred_check
      %p80 = pneg %p29
    $region23: #{tpu_custom_call.1} parent=1 // pred_check_branch
      %82 = sbr.rel (%p80) target = $region25
    $region24: #{tpu_custom_call.1} parent=1 // pred_region
      %v83 = vld [vmem:[#allocation2] sm:$0xf]
      %v84 = vld [vmem:[#allocation2 + $0x4] sm:$0xf]
      %v85 = vmul.f32 %v83, 0.00390625
      %v86 = vmul.f32 %v84, 0.00390625
      %v87 = vld [vmem:[#allocation3] sm:$0xf]
      %v88 = vld [vmem:[#allocation3 + $0x4] sm:$0xf]
      %91 = vset.pattern.permute.xlu0 0
      %92 = vperm.xlu0 %91, %v85
      %v93 = vpop.permute.xlu0 %92
      %94 = vset.pattern.permute.xlu0 0
      %95 = vperm.xlu0 %94, %v86
      %v96 = vpop.permute.xlu0 %95
      %v97 = vlaneseq
      %v98 = vand.u32 %v97, 127
      %v99 = vlaneseq
      %v100 = vshrl.u32 %v99, 7
      %v101 = vsub.s32 %v98, %v100
      %v102 = vrot.slane %v93, %v101
      %v103 = vlaneseq
      %v104 = vshrl.u32 %v103, 7
      %v105 = vsub.s32 %v98, %v104
      %v106 = vrot.slane %v96, %v105
      %vm107 = vcmask 1041409
      %v108 = vsel %vm107, %v106, %v102
      %112 = vset.pattern.permute.xlu0 0
      %113 = vperm.xlu0 %112, %v87
      %v114 = vpop.permute.xlu0 %113
      %115 = vset.pattern.permute.xlu0 0
      %116 = vperm.xlu0 %115, %v88
      %v117 = vpop.permute.xlu0 %116
      %v118 = vlaneseq
      %v119 = vshrl.u32 %v118, 7
      %v120 = vsub.s32 %v98, %v119
      %v121 = vrot.slane %v114, %v120
      %v122 = vlaneseq
      %v123 = vshrl.u32 %v122, 7
      %v124 = vsub.s32 %v98, %v123
      %v125 = vrot.slane %v117, %v124
      %vm126 = vcmask 1043459
      %v127 = vsel %vm126, %v125, %v121
      %vm129 = vcmask 1041408
      %v130 = vsel %vm129, %v108, %v127
      %v131 = vld [vmem:[%s1] sm:$0xf]
      %vm132 = vcmask 31744
      %v134 = vsel %vm132, %v130, 0
      %v137 = vsel %vm48, %v131, 0
      %139 = vmatprep.subr.mxu0 0.0
      %140 = vmatpush1.msra.mxu0 %v137
      %141 = vmatprep.subr.mxu0 0.0
      %142 = vmatpush1.msra.mxu0 0.0
      %143 = vmatprep.subr.mxu0 0.0
      %144 = vmatpush1.msra.mxu0 0.0
      %145 = vmatprep.subr.mxu0 0.0
      %146 = vmatpush1.msra.mxu0 0.0
      %147 = vmatprep.subr.mxu0 0.0
      %148 = vmatpush1.msra.mxu0 0.0
      %149 = vmatprep.subr.mxu0 0.0
      %150 = vmatpush1.msra.mxu0 0.0
      %151 = vmatprep.subr.mxu0 0.0
      %152 = vmatpush1.msra.mxu0 0.0
      %153 = vmatprep.subr.mxu0 0.0
      %154 = vmatpush1.msra.mxu0 0.0
      %155 = vmatprep.subr.mxu0 0.0
      %156 = vmatpush1.msra.mxu0 0.0
      %157 = vmatprep.subr.mxu0 0.0
      %158 = vmatpush1.msra.mxu0 0.0
      %159 = vmatprep.subr.mxu0 0.0
      %160 = vmatpush1.msra.mxu0 0.0
      %161 = vmatprep.subr.mxu0 0.0
      %162 = vmatpush1.msra.mxu0 0.0
      %163 = vmatprep.subr.mxu0 0.0
      %164 = vmatpush1.msra.mxu0 0.0
      %165 = vmatprep.subr.mxu0 0.0
      %166 = vmatpush1.msra.mxu0 0.0
      %167 = vmatprep.subr.mxu0 0.0
      %168 = vmatpush1.msra.mxu0 0.0
      %169 = vmatprep.subr.mxu0 0.0
      %170 = vmatpush1.msra.mxu0 0.0
      %171 = vmatprep.subr.mxu0 0.0
      %172 = vmatpush1.msra.mxu0 0.0
      %173 = vmatprep.subr.mxu0 0.0
      %174 = vmatpush1.msra.mxu0 0.0
      %175 = vmatprep.subr.mxu0 0.0
      %176 = vmatpush1.msra.mxu0 0.0
      %177 = vmatprep.subr.mxu0 0.0
      %178 = vmatpush1.msra.mxu0 0.0
      %179 = vmatprep.subr.mxu0 0.0
      %180 = vmatpush1.msra.mxu0 0.0
      %181 = vmatprep.subr.mxu0 0.0
      %182 = vmatpush1.msra.mxu0 0.0
      %183 = vmatprep.subr.mxu0 0.0
      %184 = vmatpush1.msra.mxu0 0.0
      %185 = vmatprep.subr.mxu0 0.0
      %186 = vmatpush1.msra.mxu0 0.0
      %187 = vmatprep.subr.mxu0 0.0
      %188 = vmatpush1.msra.mxu0 0.0
      %189 = vmatprep.subr.mxu0 0.0
      %190 = vmatpush1.msra.mxu0 0.0
      %191 = vmatprep.subr.mxu0 0.0
      %192 = vmatpush1.msra.mxu0 0.0
      %193 = vmatprep.subr.mxu0 0.0
      %194 = vmatpush1.msra.mxu0 0.0
      %195 = vmatprep.subr.mxu0 0.0
      %196 = vmatpush1.msra.mxu0 0.0
      %197 = vmatprep.subr.mxu0 0.0
      %198 = vmatpush1.msra.mxu0 0.0
      %199 = vmatprep.subr.mxu0 0.0
      %200 = vmatpush1.msra.mxu0 0.0
      %201 = vmatprep.subr.mxu0 0.0
      %202 = vmatpush1.msra.mxu0 0.0
      %203 = vmatprep.mubr.f32.mxu0 0.0
      %204 = vmatmul.mubr.f32.gmra.mrb[0].mxu0 %v134
      %v205 = vpop.f32.mrb[0].mxu0
      %v206 = vadd.f32 0.0, %v205
      %v207 = vpop.f32.mrb[0].mxu0
      %208 = vdwg.mxu0
      %v209 = vmax.f32 %v206, 0.0
      %v210 = vld [vmem:[%s2] sm:$0x3]
      %vm211 = vcmask 15360
      %v213 = vsel %vm211, %v209, 0
      %v216 = vsel %vm129, %v210, 0
      %218 = vmatprep.subr.mxu0 0.0
      %219 = vmatpush1.msra.mxu0 %v216
      %220 = vmatprep.subr.mxu0 0.0
      %221 = vmatpush1.msra.mxu0 0.0
      %222 = vmatprep.subr.mxu0 0.0
      %223 = vmatpush1.msra.mxu0 0.0
      %224 = vmatprep.subr.mxu0 0.0
      %225 = vmatpush1.msra.mxu0 0.0
      %226 = vmatprep.subr.mxu0 0.0
      %227 = vmatpush1.msra.mxu0 0.0
      %228 = vmatprep.subr.mxu0 0.0
      %229 = vmatpush1.msra.mxu0 0.0
      %230 = vmatprep.subr.mxu0 0.0
      %231 = vmatpush1.msra.mxu0 0.0
      %232 = vmatprep.subr.mxu0 0.0
      %233 = vmatpush1.msra.mxu0 0.0
      %234 = vmatprep.subr.mxu0 0.0
      %235 = vmatpush1.msra.mxu0 0.0
      %236 = vmatprep.subr.mxu0 0.0
      %237 = vmatpush1.msra.mxu0 0.0
      %238 = vmatprep.subr.mxu0 0.0
      %239 = vmatpush1.msra.mxu0 0.0
      %240 = vmatprep.subr.mxu0 0.0
      %241 = vmatpush1.msra.mxu0 0.0
      %242 = vmatprep.subr.mxu0 0.0
      %243 = vmatpush1.msra.mxu0 0.0
      %244 = vmatprep.subr.mxu0 0.0
      %245 = vmatpush1.msra.mxu0 0.0
      %246 = vmatprep.subr.mxu0 0.0
      %247 = vmatpush1.msra.mxu0 0.0
      %248 = vmatprep.subr.mxu0 0.0
      %249 = vmatpush1.msra.mxu0 0.0
      %250 = vmatprep.subr.mxu0 0.0
      %251 = vmatpush1.msra.mxu0 0.0
      %252 = vmatprep.subr.mxu0 0.0
      %253 = vmatpush1.msra.mxu0 0.0
      %254 = vmatprep.subr.mxu0 0.0
      %255 = vmatpush1.msra.mxu0 0.0
      %256 = vmatprep.subr.mxu0 0.0
      %257 = vmatpush1.msra.mxu0 0.0
      %258 = vmatprep.subr.mxu0 0.0
      %259 = vmatpush1.msra.mxu0 0.0
      %260 = vmatprep.subr.mxu0 0.0
      %261 = vmatpush1.msra.mxu0 0.0
      %262 = vmatprep.subr.mxu0 0.0
      %263 = vmatpush1.msra.mxu0 0.0
      %264 = vmatprep.subr.mxu0 0.0
      %265 = vmatpush1.msra.mxu0 0.0
      %266 = vmatprep.subr.mxu0 0.0
      %267 = vmatpush1.msra.mxu0 0.0
      %268 = vmatprep.subr.mxu0 0.0
      %269 = vmatpush1.msra.mxu0 0.0
      %270 = vmatprep.subr.mxu0 0.0
      %271 = vmatpush1.msra.mxu0 0.0
      %272 = vmatprep.subr.mxu0 0.0
      %273 = vmatpush1.msra.mxu0 0.0
      %274 = vmatprep.subr.mxu0 0.0
      %275 = vmatpush1.msra.mxu0 0.0
      %276 = vmatprep.subr.mxu0 0.0
      %277 = vmatpush1.msra.mxu0 0.0
      %278 = vmatprep.subr.mxu0 0.0
      %279 = vmatpush1.msra.mxu0 0.0
      %280 = vmatprep.subr.mxu0 0.0
      %281 = vmatpush1.msra.mxu0 0.0
      %282 = vmatprep.mubr.f32.mxu0 0.0
      %283 = vmatmul.mubr.f32.gmra.mrb[0].mxu0 %v213
      %v284 = vpop.f32.mrb[0].mxu0
      %v285 = vadd.f32 0.0, %v284
      %v286 = vpop.f32.mrb[0].mxu0
      %287 = vdwg.mxu0
      %v289 = vrot.slane %v285, 2
      %v291 = vadd.f32 %v285, %v289
      %v292 = vxor.u32 %v291, 2147483648
      %v293 = vmul.f32 %v292, 1.442695
      %v294 = vpow.pop %v293
      %v295 = vadd.f32 %v294, 1.0
      %v296 = vrcp.pop %v295
      %v297 = vmul.f32 1.0, %v296
      %v300 = vunpack.c.l.s4 1966171168
      %v301 = vunpack.c.0.s8 %v300
      %v302 = vlaneseq
      %v303 = vshrl.u32 %v302, 7
      %v304 = vsub.s32 %v301, %v303
      %v305 = vrot.slane %v297, %v304
      %v306 = vcombine.high %v305, %v305
      %v308 = vunpack.c.l.s4 1966171168
      %v309 = vunpack.c.0.s8 %v308
      %v310 = vlaneseq
      %v311 = vshrl.u32 %v310, 7
      %v312 = vsub.s32 %v309, %v311
      %v313 = vrot.slane %v305, %v312
      %v315 = vunpack.c.l.s4 1966171168
      %v316 = vunpack.c.0.s8 %v315
      %v317 = vlaneseq
      %v318 = vshrl.u32 %v317, 7
      %v319 = vsub.s32 %v316, %v318
      %v320 = vrot.slane %v306, %v319
      %vm323 = vcmask 24576
      %324 = vst.msk [vmem:[#allocation7] sm:$0x1] %vm323, %v313
      %325 = vst.msk [vmem:[#allocation7 + $0x1] sm:$0x1] %vm323, %v320
    $region25: #{tpu_custom_call.1} parent=1 // pred_fallthru
      _
    // Predicated region
    $region26: #{tpu_custom_call.1} parent=1 // pred_check
      _
    $region27: #{tpu_custom_call.1} parent=1 // pred_check_branch
      %327 = sbr.rel (0) target = $region29
    $region28: #{tpu_custom_call.1} parent=1 // pred_region
      %s329 = ssub.s32 32, 32
      %330 = vsyncadd [#allocation6], %s329
      %s331 = sshll.u32 [#allocation7], 4
      %s332 = int_to_ptr.vmem [resolvable:$true] %s331
      %337 = dma.vmem_to_hbm [thread:$0]  %s332, 32, %s3, [#allocation6], 16, 16, 1
    $region29: #{tpu_custom_call.1} parent=1 // pred_fallthru
      _
    // Predicated region
    $region30: #{tpu_custom_call.1} parent=1 // pred_check
      _
    $region31: #{tpu_custom_call.1} parent=1 // pred_check_branch
      %339 = sbr.rel (0) target = $region33
    $region32: #{tpu_custom_call.1} parent=1 // pred_region
      %340 = dma.done [#allocation6], 32
    $region33: #{tpu_custom_call.1} parent=1 // pred_fallthru
      _
    %341 = vsyncpa [#allocation5], 1
    %342 = vsyncpa [#allocation6], 1

</llo_original>
